<compile_context>
chip_gen: v6e
topology: v6e:2x2x1
jax: 0.10.0
libtpu: 0.0.40
codegen_flags: <defaults>
</compile_context>

<pallas_src>
import functools

import jax
import jax.numpy as jnp
from jax import lax
from jax.experimental import pallas as pl
from jax.experimental.pallas import tpu as pltpu


def _time_encoder_dot_kernel(x_ref, m_ref, tab_ref, o_ref):
    """out = x + [1 | mask] @ [[emb0] ; [delta rows]]   (MXU path).

    x_ref:   (TR, W)   activations, lane-dense
    m_ref:   (TR, Gp)  int8; column 0 is the constant 1, columns 1..G are the per-group
                       mask bits in {0,1}
    tab_ref: (Gp, W)   f32; row 0 = emb0 tiled across groups, rows 1..G = block-diagonal
                       (emb1 - emb0), one row per lane group
    o_ref:   (TR, W)
    """
    m = m_ref[...].astype(jnp.float32)                       # tiny VPU cast: Gp cols/row
    enc = jnp.dot(m, tab_ref[...],                           # (TR,Gp)@(Gp,W) on the MXU
                  preferred_element_type=jnp.float32,
                  precision=lax.Precision.HIGHEST)           # exact-ish f32 multipass
    o_ref[...] = (x_ref[...].astype(jnp.float32) + enc).astype(o_ref.dtype)


def _time_encoder_fma_kernel(x_ref, m_ref, tab_ref, o_ref, *, num_groups):
    """Same operand contract as the dot kernel; pure-VPU fallback (no MXU)."""
    acc = x_ref[...].astype(jnp.float32) + tab_ref[0:1, :]   # sublane-broadcast emb0
    m = m_ref[...].astype(jnp.float32)
    for g in range(num_groups):                               # static unroll, G is small
        acc = acc + m[:, g + 1:g + 2] * tab_ref[g + 1:g + 2, :]
    o_ref[...] = acc.astype(o_ref.dtype)


def time_encoder(x, mark, mask, emb_table, *, target_block_bytes=4 * 1024 * 1024):
    """x: (B, L, D) float, mark: unused, mask: (B, L) int in {0,1}, emb_table: (2, D)."""
    del mark  # unused by the reference forward pass
    B, L, D = x.shape
    R = B * L
    dtype = x.dtype
    LANES = 128

    emb0 = emb_table[0].astype(jnp.float32)
    delta = (emb_table[1].astype(jnp.float32) - emb0)

    # ---- Lane-dense packing plan (output last dim always a multiple of 128). ----
    # TODO(synk): mask values outside {0,1} are extrapolated by the affine form instead
    # of raising like nn.Embedding would.
    if D % LANES == 0:
        G, Dp = 1, D
    elif D < LANES and LANES % D == 0:
        G, Dp = LANES // D, D
    else:
        G, Dp = 1, ((D + LANES - 1) // LANES) * LANES        # pad features to 128 mult.
    W = G * Dp

    if Dp != D:
        emb0 = jnp.pad(emb0, (0, Dp - D))
        delta = jnp.pad(delta, (0, Dp - D))

    # ---- Row tiling: ~4 MiB x blocks, TR multiple of 32 (or full extent), padded so
    # every grid step is a full tile (no masked tail stores). ----
    bytes_per_row = W * jnp.dtype(dtype).itemsize
    tr = max(32, (target_block_bytes // bytes_per_row) // 32 * 32)
    Rp0 = (R + G - 1) // G                                   # group rows before padding
    TR = Rp0 if Rp0 <= tr else tr
    Rp = ((Rp0 + TR - 1) // TR) * TR                         # group rows, multiple of TR
    R_pad = Rp * G                                           # flat rows after padding

    xf = x.reshape(R, D)
    if Dp != D:
        xf = jnp.pad(xf, ((0, 0), (0, Dp - D)))
    if R_pad != R:
        xf = jnp.pad(xf, ((0, R_pad - R), (0, 0)))
    x2 = xf.reshape(Rp, W)

    mf = mask.reshape(R).astype(jnp.int8)
    if R_pad != R:
        mf = jnp.pad(mf, (0, R_pad - R))
    m2 = mf.reshape(Rp, G)
    # Augment with a constant-1 column so emb0 rides the same dot as the deltas.
    m_aug = jnp.concatenate([jnp.ones((Rp, 1), jnp.int8), m2], axis=1)   # (Rp, G+1) int8

    emb0_w = jnp.tile(emb0, G).reshape(1, W)
    delta_rows = jnp.kron(jnp.eye(G, dtype=jnp.float32), delta.reshape(1, Dp))  # (G, W)
    table_aug = jnp.concatenate([emb0_w, delta_rows], axis=0)            # (G+1, W) f32

    Gp = G + 1
    grid = (Rp // TR,)

    def _build(kernel, dim_sem):
        return pl.pallas_call(
            kernel,
            out_shape=jax.ShapeDtypeStruct((Rp, W), dtype),
            grid_spec=pltpu.PrefetchScalarGridSpec(
                num_scalar_prefetch=0,
                grid=grid,
                in_specs=[
                    pl.BlockSpec((TR, W), lambda i: (i, 0)),    # x tile (streams)
                    pl.BlockSpec((TR, Gp), lambda i: (i, 0)),   # int8 mask+ones tile
                    pl.BlockSpec((Gp, W), lambda i: (0, 0)),    # table (resident, tiny)
                ],
                out_specs=pl.BlockSpec((TR, W), lambda i: (i, 0)),
            ),
            # Output reuses x2's HBM buffer (x2 is a wrapper-local reshape/pad copy).
            input_output_aliases={0: 0},
            compiler_params=pltpu.CompilerParams(
                dimension_semantics=(dim_sem,),
                # ~4 MiB x/out blocks double-buffered + int8 mask blocks ≈ 18 MiB:
                # above v5e's 16 MiB default scoped VMEM, so raise it explicitly.
                vmem_limit_bytes=32 * 1024 * 1024,
            ),
        )

    fma_kernel = functools.partial(_time_encoder_fma_kernel, num_groups=G)
    attempts = (
        (_time_encoder_dot_kernel, pltpu.CORE_PARALLEL),   # split across v7x's 2 TCs
        (_time_encoder_dot_kernel, pltpu.PARALLEL),        # single-TC chips / fallback
        (fma_kernel, pltpu.PARALLEL),                      # pure-VPU last resort
    )
    last_err = None
    out2 = None
    for kern, sem in attempts:
        try:
            out2 = _build(kern, sem)(x2, m_aug, table_aug)
            break
        except Exception as e:  # lowering rejected this variant; try the next one
            last_err = e
    if out2 is None:
        raise last_err

    out = out2.reshape(R_pad, Dp)[:R, :D]
    return out.reshape(B, L, D)


if __name__ == "__main__":
    key = jax.random.PRNGKey(0)
    B, L, D = 2, 8, 32          # batch, seq, d_model

    kx, kmark, kmask, kemb = jax.random.split(key, 4)
    x = jax.random.normal(kx, (B, L, D), dtype=jnp.float32)
    mark = jax.random.normal(kmark, (B, L, 4), dtype=jnp.float32)   # unused by forward
    mask = jax.random.bernoulli(kmask, 0.5, (B, L)).astype(jnp.int32)
    # Deterministic "init" of nn.Embedding(2, d_model) weight (normal(0,1) like PyTorch).
    emb_table = jax.random.normal(kemb, (2, D), dtype=jnp.float32)

    out = time_encoder(x, mark, mask, emb_table)
    out = jax.block_until_ready(out)

    # Pure-JAX reference check (affine form differs from direct gather by ~1 ulp).
    ref = x + emb_table[mask]
    assert out.shape == (B, L, D)
    assert jnp.allclose(out, ref, atol=1e-5, rtol=1e-5), "mismatch vs reference"

    print("KERNEL_OK")
</pallas_src>

<mosaic_0001>
module attributes {stable_mosaic.version = 11 : i64} {
  func.func @_time_encoder_dot_kernel(%arg0: i32, %arg1: memref<4x128xf32, #tpu.memory_space<vmem>>, %arg2: memref<4x5xi8, #tpu.memory_space<vmem>>, %arg3: memref<5x128xf32, #tpu.memory_space<vmem>>, %arg4: memref<4x128xf32, #tpu.memory_space<vmem>>) attributes {dimension_semantics = [#tpu.dimension_semantics<core_parallel>], iteration_bounds = array<i64: 1>, scalar_prefetch = 0 : i64, scratch_operands = 0 : i64, tpu.core_type = #tpu.core_type<tc>, window_params = [{transform_indices = @transform_0, window_bounds = array<i64: 4, 128>}, {transform_indices = @transform_1, window_bounds = array<i64: 4, 5>}, {pipeline_mode = #tpu.pipeline_mode<synchronous>, transform_indices = @transform_2, window_bounds = array<i64: 5, 128>}, {transform_indices = @transform_3, window_bounds = array<i64: 4, 128>}]} {
    %c0 = arith.constant 0 : index
    %c0_0 = arith.constant 0 : index
    %0 = vector.load %arg2[%c0, %c0_0] : memref<4x5xi8, #tpu.memory_space<vmem>>, vector<4x5xi8>
    %1 = arith.sitofp %0 : vector<4x5xi8> to vector<4x5xf32>
    %c0_1 = arith.constant 0 : index
    %c0_2 = arith.constant 0 : index
    %2 = vector.load %arg3[%c0_1, %c0_2] : memref<5x128xf32, #tpu.memory_space<vmem>>, vector<5x128xf32>
    %cst = arith.constant dense<0.000000e+00> : vector<4x128xf32>
    %3 = tpu.matmul %1, %2, %cst {dimension_numbers = #tpu.dot_dimension_numbers<[1], [0], [0], [1], [0, 0, 1, 1], [], []>, precision = #tpu.contract_precision<fp32>} : vector<4x5xf32>, vector<5x128xf32>, vector<4x128xf32> -> vector<4x128xf32>
    %c0_3 = arith.constant 0 : index
    %c0_4 = arith.constant 0 : index
    %4 = vector.load %arg1[%c0_3, %c0_4] : memref<4x128xf32, #tpu.memory_space<vmem>>, vector<4x128xf32>
    %5 = arith.addf %4, %3 : vector<4x128xf32>
    %c0_5 = arith.constant 0 : index
    %c0_6 = arith.constant 0 : index
    %6 = vector.load %arg4[%c0_5, %c0_6] : memref<4x128xf32, #tpu.memory_space<vmem>>, vector<4x128xf32>
    tpu.vector_store %arg4[%c0_5, %c0_6], %5 {strides = array<i32>} : memref<4x128xf32, #tpu.memory_space<vmem>>, vector<4x128xf32>,
    return
  }
  func.func @transform_0(%arg0: i32) -> (i32, i32) {
    %c0_i32 = arith.constant 0 : i32
    %c0_i32_0 = arith.constant 0 : i32
    return %arg0, %c0_i32 : i32, i32
  }
  func.func @transform_1(%arg0: i32) -> (i32, i32) {
    %c0_i32 = arith.constant 0 : i32
    %c0_i32_0 = arith.constant 0 : i32
    return %arg0, %c0_i32 : i32, i32
  }
  func.func @transform_2(%arg0: i32) -> (i32, i32) {
    %c0_i32 = arith.constant 0 : i32
    %c0_i32_0 = arith.constant 0 : i32
    %c0_i32_1 = arith.constant 0 : i32
    return %c0_i32, %c0_i32_0 : i32, i32
  }
  func.func @transform_3(%arg0: i32) -> (i32, i32) {
    %c0_i32 = arith.constant 0 : i32
    %c0_i32_0 = arith.constant 0 : i32
    return %arg0, %c0_i32 : i32, i32
  }
}

module attributes {stable_mosaic.version = 11 : i64} {
  func.func @_time_encoder_dot_kernel(%arg0: i32, %arg1: memref<4x128xf32, #tpu.memory_space<vmem>>, %arg2: memref<4x5xi8, #tpu.memory_space<vmem>>, %arg3: memref<5x128xf32, #tpu.memory_space<vmem>>, %arg4: memref<4x128xf32, #tpu.memory_space<vmem>>) attributes {dimension_semantics = [#tpu.dimension_semantics<parallel>], iteration_bounds = array<i64: 1>, scalar_prefetch = 0 : i64, scratch_operands = 0 : i64, tpu.core_type = #tpu.core_type<tc>, window_params = [{transform_indices = @transform_0, window_bounds = array<i64: 4, 128>}, {transform_indices = @transform_1, window_bounds = array<i64: 4, 5>}, {pipeline_mode = #tpu.pipeline_mode<synchronous>, transform_indices = @transform_2, window_bounds = array<i64: 5, 128>}, {transform_indices = @transform_3, window_bounds = array<i64: 4, 128>}]} {
    %c0 = arith.constant 0 : index
    %c0_0 = arith.constant 0 : index
    %0 = vector.load %arg2[%c0, %c0_0] : memref<4x5xi8, #tpu.memory_space<vmem>>, vector<4x5xi8>
    %1 = arith.sitofp %0 : vector<4x5xi8> to vector<4x5xf32>
    %c0_1 = arith.constant 0 : index
    %c0_2 = arith.constant 0 : index
    %2 = vector.load %arg3[%c0_1, %c0_2] : memref<5x128xf32, #tpu.memory_space<vmem>>, vector<5x128xf32>
    %cst = arith.constant dense<0.000000e+00> : vector<4x128xf32>
    %3 = tpu.matmul %1, %2, %cst {dimension_numbers = #tpu.dot_dimension_numbers<[1], [0], [0], [1], [0, 0, 1, 1], [], []>, precision = #tpu.contract_precision<fp32>} : vector<4x5xf32>, vector<5x128xf32>, vector<4x128xf32> -> vector<4x128xf32>
    %c0_3 = arith.constant 0 : index
    %c0_4 = arith.constant 0 : index
    %4 = vector.load %arg1[%c0_3, %c0_4] : memref<4x128xf32, #tpu.memory_space<vmem>>, vector<4x128xf32>
    %5 = arith.addf %4, %3 : vector<4x128xf32>
    %c0_5 = arith.constant 0 : index
    %c0_6 = arith.constant 0 : index
    %6 = vector.load %arg4[%c0_5, %c0_6] : memref<4x128xf32, #tpu.memory_space<vmem>>, vector<4x128xf32>
    tpu.vector_store %arg4[%c0_5, %c0_6], %5 {strides = array<i32>} : memref<4x128xf32, #tpu.memory_space<vmem>>, vector<4x128xf32>,
    return
  }
  func.func @transform_0(%arg0: i32) -> (i32, i32) {
    %c0_i32 = arith.constant 0 : i32
    %c0_i32_0 = arith.constant 0 : i32
    return %arg0, %c0_i32 : i32, i32
  }
  func.func @transform_1(%arg0: i32) -> (i32, i32) {
    %c0_i32 = arith.constant 0 : i32
    %c0_i32_0 = arith.constant 0 : i32
    return %arg0, %c0_i32 : i32, i32
  }
  func.func @transform_2(%arg0: i32) -> (i32, i32) {
    %c0_i32 = arith.constant 0 : i32
    %c0_i32_0 = arith.constant 0 : i32
    %c0_i32_1 = arith.constant 0 : i32
    return %c0_i32, %c0_i32_0 : i32, i32
  }
  func.func @transform_3(%arg0: i32) -> (i32, i32) {
    %c0_i32 = arith.constant 0 : i32
    %c0_i32_0 = arith.constant 0 : i32
    return %arg0, %c0_i32 : i32, i32
  }
}

module attributes {stable_mosaic.version = 11 : i64} {
  func.func @_time_encoder_fma_kernel(%arg0: i32, %arg1: memref<4x128xf32, #tpu.memory_space<vmem>>, %arg2: memref<4x5xi8, #tpu.memory_space<vmem>>, %arg3: memref<5x128xf32, #tpu.memory_space<vmem>>, %arg4: memref<4x128xf32, #tpu.memory_space<vmem>>) attributes {dimension_semantics = [#tpu.dimension_semantics<parallel>], iteration_bounds = array<i64: 1>, scalar_prefetch = 0 : i64, scratch_operands = 0 : i64, tpu.core_type = #tpu.core_type<tc>, window_params = [{transform_indices = @transform_0, window_bounds = array<i64: 4, 128>}, {transform_indices = @transform_1, window_bounds = array<i64: 4, 5>}, {pipeline_mode = #tpu.pipeline_mode<synchronous>, transform_indices = @transform_2, window_bounds = array<i64: 5, 128>}, {transform_indices = @transform_3, window_bounds = array<i64: 4, 128>}]} {
    %c0 = arith.constant 0 : index
    %c0_0 = arith.constant 0 : index
    %0 = vector.load %arg1[%c0, %c0_0] : memref<4x128xf32, #tpu.memory_space<vmem>>, vector<4x128xf32>
    %c0_1 = arith.constant 0 : index
    %c0_2 = arith.constant 0 : index
    %1 = vector.load %arg3[%c0_1, %c0_2] : memref<5x128xf32, #tpu.memory_space<vmem>>, vector<1x128xf32>
    %2 = vector.broadcast %1 : vector<1x128xf32> to vector<4x128xf32>
    %3 = arith.addf %0, %2 : vector<4x128xf32>
    %c0_3 = arith.constant 0 : index
    %c0_4 = arith.constant 0 : index
    %4 = vector.load %arg2[%c0_3, %c0_4] : memref<4x5xi8, #tpu.memory_space<vmem>>, vector<4x5xi8>
    %5 = arith.sitofp %4 : vector<4x5xi8> to vector<4x5xf32>
    %6 = vector.extract_strided_slice %5 {offsets = [0, 1], sizes = [4, 1], strides = [1, 1]} : vector<4x5xf32> to vector<4x1xf32>
    %c1 = arith.constant 1 : index
    %c0_5 = arith.constant 0 : index
    %7 = vector.load %arg3[%c1, %c0_5] : memref<5x128xf32, #tpu.memory_space<vmem>>, vector<1x128xf32>
    %8 = vector.broadcast %6 : vector<4x1xf32> to vector<4x128xf32>
    %9 = vector.broadcast %7 : vector<1x128xf32> to vector<4x128xf32>
    %10 = arith.mulf %8, %9 : vector<4x128xf32>
    %11 = arith.addf %3, %10 : vector<4x128xf32>
    %12 = vector.extract_strided_slice %5 {offsets = [0, 2], sizes = [4, 1], strides = [1, 1]} : vector<4x5xf32> to vector<4x1xf32>
    %c2 = arith.constant 2 : index
    %c0_6 = arith.constant 0 : index
    %13 = vector.load %arg3[%c2, %c0_6] : memref<5x128xf32, #tpu.memory_space<vmem>>, vector<1x128xf32>
    %14 = vector.broadcast %12 : vector<4x1xf32> to vector<4x128xf32>
    %15 = vector.broadcast %13 : vector<1x128xf32> to vector<4x128xf32>
    %16 = arith.mulf %14, %15 : vector<4x128xf32>
    %17 = arith.addf %11, %16 : vector<4x128xf32>
    %18 = vector.extract_strided_slice %5 {offsets = [0, 3], sizes = [4, 1], strides = [1, 1]} : vector<4x5xf32> to vector<4x1xf32>
    %c3 = arith.constant 3 : index
    %c0_7 = arith.constant 0 : index
    %19 = vector.load %arg3[%c3, %c0_7] : memref<5x128xf32, #tpu.memory_space<vmem>>, vector<1x128xf32>
    %20 = vector.broadcast %18 : vector<4x1xf32> to vector<4x128xf32>
    %21 = vector.broadcast %19 : vector<1x128xf32> to vector<4x128xf32>
    %22 = arith.mulf %20, %21 : vector<4x128xf32>
    %23 = arith.addf %17, %22 : vector<4x128xf32>
    %24 = vector.extract_strided_slice %5 {offsets = [0, 4], sizes = [4, 1], strides = [1, 1]} : vector<4x5xf32> to vector<4x1xf32>
    %c4 = arith.constant 4 : index
    %c0_8 = arith.constant 0 : index
    %25 = vector.load %arg3[%c4, %c0_8] : memref<5x128xf32, #tpu.memory_space<vmem>>, vector<1x128xf32>
    %26 = vector.broadcast %24 : vector<4x1xf32> to vector<4x128xf32>
    %27 = vector.broadcast %25 : vector<1x128xf32> to vector<4x128xf32>
    %28 = arith.mulf %26, %27 : vector<4x128xf32>
    %29 = arith.addf %23, %28 : vector<4x128xf32>
    %c0_9 = arith.constant 0 : index
    %c0_10 = arith.constant 0 : index
    %30 = vector.load %arg4[%c0_9, %c0_10] : memref<4x128xf32, #tpu.memory_space<vmem>>, vector<4x128xf32>
    tpu.vector_store %arg4[%c0_9, %c0_10], %29 {strides = array<i32>} : memref<4x128xf32, #tpu.memory_space<vmem>>, vector<4x128xf32>,
    return
  }
  func.func @transform_0(%arg0: i32) -> (i32, i32) {
    %c0_i32 = arith.constant 0 : i32
    %c0_i32_0 = arith.constant 0 : i32
    return %arg0, %c0_i32 : i32, i32
  }
  func.func @transform_1(%arg0: i32) -> (i32, i32) {
    %c0_i32 = arith.constant 0 : i32
    %c0_i32_0 = arith.constant 0 : i32
    return %arg0, %c0_i32 : i32, i32
  }
  func.func @transform_2(%arg0: i32) -> (i32, i32) {
    %c0_i32 = arith.constant 0 : i32
    %c0_i32_0 = arith.constant 0 : i32
    %c0_i32_1 = arith.constant 0 : i32
    return %c0_i32, %c0_i32_0 : i32, i32
  }
  func.func @transform_3(%arg0: i32) -> (i32, i32) {
    %c0_i32 = arith.constant 0 : i32
    %c0_i32_0 = arith.constant 0 : i32
    return %arg0, %c0_i32 : i32, i32
  }
}

</mosaic_0001>

<llo_original>
// kernel: tpu_custom_call.1
$region0: #{tpu_custom_call.1}
  #allocation0 [shape = 'u32[]', space=smem, size = 0x4, offset = 0x4, fixed_abs, tag = 'smem constant byte address 0x4 - core index']
  #allocation1 [shape = 'u32[144,128]{1,0:T(1,128)}', space=vmem, size = 0x12000, scoped, tag = 'internal scratch']
  %s0 = inlined_call_operand.hbm [shape: f32[4,128], index: 0, kind: input, shape index: {}, may-alias: {0,3}]
  %s1 = inlined_call_operand.vmem [shape: s8[4,5], index: 1, kind: input, shape index: {}]
  %s2 = inlined_call_operand.vmem [shape: f32[5,128], index: 2, kind: input, shape index: {}]
  %s3 = inlined_call_operand.hbm [shape: f32[4,128], index: 3, kind: output, shape index: {}, may-alias: {0,3}]
  %s4 = sld [smem:[#allocation0]]
  $region26: #{tpu_custom_call.1} parent=0
    _
  %s6 = ssub.s32 1, %s4
  %s7 = scalar_select 0, %s6, %s4
  $region1: #{tpu_custom_call.1} parent=0
    #allocation2 [shape = 'u8[2048]{0}', space=vmem, size = 0x800, scoped, tag = 'input window, operand 0, single buffered']
    #allocation3 [shape = 's32[1]{0}', space=sflag, size = 0x4, scoped, tag = 'scoped memory for tpu_custom_call.1']
    #allocation4 [shape = 's32[1]{0}', space=sflag, size = 0x4, scoped, tag = 'scoped memory for tpu_custom_call.1']
    #allocation5 [shape = 'u8[2048]{0}', space=vmem, size = 0x800, scoped, tag = 'output window, operand 0, single buffered']
    %8 = vsyncpa [#allocation3], 0
    %9 = vsyncpa [#allocation4], 0
    // Predicated region
    $region2: #{tpu_custom_call.1} parent=1 // pred_check
      _
    $region3: #{tpu_custom_call.1} parent=1 // pred_check_branch
      %11 = sbr.rel (0) target = $region5
    $region4: #{tpu_custom_call.1} parent=1 // pred_region
      %s13 = ssub.s32 64, 64
      %14 = vsyncadd [#allocation3], %s13
      %s15 = smul.addr %s7, 64
      %s16 = scalar_lea.hbm %s0, %s15
      %s18 = sshll.u32 [#allocation2], 4
      %s19 = int_to_ptr.vmem [resolvable:$true] %s18
      %21 = dma.hbm_to_vmem [thread:$0]  %s16, 64, %s19, [#allocation3]
    $region5: #{tpu_custom_call.1} parent=1 // pred_fallthru
      _
    // Predicated region
    $region6: #{tpu_custom_call.1} parent=1 // pred_check
      _
    $region7: #{tpu_custom_call.1} parent=1 // pred_check_branch
      %23 = sbr.rel (0) target = $region9
    $region8: #{tpu_custom_call.1} parent=1 // pred_region
      %p24 = scmp.lt.s32.totalorder %s7, 0
      %s25 = scalar_select %p24, %s7, 0
      %s26 = scalar_lea.vmem %s1, %s25
    $region9: #{tpu_custom_call.1} parent=1 // pred_fallthru
      _
    // Predicated region
    $region10: #{tpu_custom_call.1} parent=1 // pred_check
      _
    $region11: #{tpu_custom_call.1} parent=1 // pred_check_branch
      %28 = sbr.rel (0) target = $region13
    $region12: #{tpu_custom_call.1} parent=1 // pred_region
      _
    $region13: #{tpu_custom_call.1} parent=1 // pred_fallthru
      _
    // Predicated region
    $region14: #{tpu_custom_call.1} parent=1 // pred_check
      _
    $region15: #{tpu_custom_call.1} parent=1 // pred_check_branch
      %30 = sbr.rel (0) target = $region17
    $region16: #{tpu_custom_call.1} parent=1 // pred_region
      %31 = dma.done [#allocation3], 64
    $region17: #{tpu_custom_call.1} parent=1 // pred_fallthru
      _
    %p32 = scmp.lt.s32.totalorder %s7, 0
    %s33 = scalar_select %p32, %s7, 0
    %s34 = scalar_lea.vmem %s1, %s33
    %p35 = scmp.lt.s32.totalorder %s7, 0
    %s36 = scalar_select %p35, %s7, 0
    %s37 = scalar_lea.vmem %s1, %s36
    %v38 = vld [vmem:[%s37] sm:$0x1]
    %v39 = vunpack.c.0.s8 %v38
    %v40 = vcvt.s32.f32 %v39
    %v41 = vld [vmem:[%s2] sm:$0x1f]
    %vm42 = vcmask 39936
    %v44 = vsel %vm42, %v40, 0
    %vm46 = vcmask 1044480
    %v48 = vsel %vm46, %v41, 0
    %50 = vmatprep.subr.mxu0 0.0
    %51 = vmatpush1.msra.mxu0 0.0
    %52 = vmatprep.subr.mxu0 0.0
    %53 = vmatpush1.msra.mxu0 0.0
    %54 = vmatprep.subr.mxu0 0.0
    %55 = vmatpush1.msra.mxu0 0.0
    %56 = vmatprep.subr.mxu0 0.0
    %57 = vmatpush1.msra.mxu0 0.0
    %58 = vmatprep.subr.mxu0 0.0
    %59 = vmatpush1.msra.mxu0 0.0
    %60 = vmatprep.subr.mxu0 0.0
    %61 = vmatpush1.msra.mxu0 0.0
    %62 = vmatprep.subr.mxu0 0.0
    %63 = vmatpush1.msra.mxu0 0.0
    %64 = vmatprep.subr.mxu0 0.0
    %65 = vmatpush1.msra.mxu0 0.0
    %66 = vmatprep.subr.mxu0 0.0
    %67 = vmatpush1.msra.mxu0 0.0
    %68 = vmatprep.subr.mxu0 0.0
    %69 = vmatpush1.msra.mxu0 0.0
    %70 = vmatprep.subr.mxu0 0.0
    %71 = vmatpush1.msra.mxu0 0.0
    %72 = vmatprep.subr.mxu0 0.0
    %73 = vmatpush1.msra.mxu0 0.0
    %74 = vmatprep.subr.mxu0 0.0
    %75 = vmatpush1.msra.mxu0 0.0
    %76 = vmatprep.subr.mxu0 0.0
    %77 = vmatpush1.msra.mxu0 0.0
    %78 = vmatprep.subr.mxu0 0.0
    %79 = vmatpush1.msra.mxu0 0.0
    %80 = vmatprep.subr.mxu0 0.0
    %v81 = vand.u32 %v48, 4294901760
    %82 = vmatpush1.msra.mxu0 %v81
    %83 = vmatprep.subr.mxu0 0.0
    %84 = vmatpush2.msra.mxu0 0.0
    %85 = vmatprep.subr.mxu0 0.0
    %86 = vmatpush2.msra.mxu0 0.0
    %87 = vmatprep.subr.mxu0 0.0
    %88 = vmatpush2.msra.mxu0 0.0
    %89 = vmatprep.subr.mxu0 0.0
    %90 = vmatpush2.msra.mxu0 0.0
    %91 = vmatprep.subr.mxu0 0.0
    %92 = vmatpush2.msra.mxu0 0.0
    %93 = vmatprep.subr.mxu0 0.0
    %94 = vmatpush2.msra.mxu0 0.0
    %95 = vmatprep.subr.mxu0 0.0
    %96 = vmatpush2.msra.mxu0 0.0
    %97 = vmatprep.subr.mxu0 0.0
    %98 = vmatpush2.msra.mxu0 0.0
    %99 = vmatprep.subr.mxu0 0.0
    %100 = vmatpush2.msra.mxu0 0.0
    %101 = vmatprep.subr.mxu0 0.0
    %102 = vmatpush2.msra.mxu0 0.0
    %103 = vmatprep.subr.mxu0 0.0
    %104 = vmatpush2.msra.mxu0 0.0
    %105 = vmatprep.subr.mxu0 0.0
    %106 = vmatpush2.msra.mxu0 0.0
    %107 = vmatprep.subr.mxu0 0.0
    %108 = vmatpush2.msra.mxu0 0.0
    %109 = vmatprep.subr.mxu0 0.0
    %110 = vmatpush2.msra.mxu0 0.0
    %111 = vmatprep.subr.mxu0 0.0
    %112 = vmatpush2.msra.mxu0 0.0
    %113 = vmatprep.subr.mxu0 0.0
    %114 = vmatpush2.msra.mxu0 0.0
    %115 = vmatprep.mubr.f32.mxu0 0.0
    %v116 = vand.u32 %v44, 4294901760
    %v117 = vsub.f32 %v44, %v116
    %v118 = vand.u32 %v117, 4294901760
    %v119 = vsub.f32 %v117, %v118
    %v120 = vand.u32 %v119, 4294901760
    %121 = vmatmul.mubr.f32.gmra.mxu0 %v120
    %v122 = vpop.f32.mrf.mxu0
    %v123 = vadd.f32 0.0, %v122
    %v124 = vpop.f32.mrf.mxu0
    %125 = vdwg.mxu0
    %126 = vmatprep.subr.mxu0 0.0
    %127 = vmatpush1.msra.mxu0 0.0
    %128 = vmatprep.subr.mxu0 0.0
    %129 = vmatpush1.msra.mxu0 0.0
    %130 = vmatprep.subr.mxu0 0.0
    %131 = vmatpush1.msra.mxu0 0.0
    %132 = vmatprep.subr.mxu0 0.0
    %133 = vmatpush1.msra.mxu0 0.0
    %134 = vmatprep.subr.mxu0 0.0
    %135 = vmatpush1.msra.mxu0 0.0
    %136 = vmatprep.subr.mxu0 0.0
    %137 = vmatpush1.msra.mxu0 0.0
    %138 = vmatprep.subr.mxu0 0.0
    %139 = vmatpush1.msra.mxu0 0.0
    %140 = vmatprep.subr.mxu0 0.0
    %141 = vmatpush1.msra.mxu0 0.0
    %142 = vmatprep.subr.mxu0 0.0
    %143 = vmatpush1.msra.mxu0 0.0
    %144 = vmatprep.subr.mxu0 0.0
    %145 = vmatpush1.msra.mxu0 0.0
    %146 = vmatprep.subr.mxu0 0.0
    %147 = vmatpush1.msra.mxu0 0.0
    %148 = vmatprep.subr.mxu0 0.0
    %149 = vmatpush1.msra.mxu0 0.0
    %150 = vmatprep.subr.mxu0 0.0
    %151 = vmatpush1.msra.mxu0 0.0
    %152 = vmatprep.subr.mxu0 0.0
    %153 = vmatpush1.msra.mxu0 0.0
    %154 = vmatprep.subr.mxu0 0.0
    %155 = vmatpush1.msra.mxu0 0.0
    %156 = vmatprep.subr.mxu0 0.0
    %v157 = vand.u32 %v48, 4294901760
    %v158 = vsub.f32 %v48, %v157
    %v159 = vand.u32 %v158, 4294901760
    %v160 = vsub.f32 %v158, %v159
    %v161 = vand.u32 %v160, 4294901760
    %162 = vmatpush1.msra.mxu0 %v161
    %163 = vmatprep.subr.mxu0 0.0
    %164 = vmatpush2.msra.mxu0 0.0
    %165 = vmatprep.subr.mxu0 0.0
    %166 = vmatpush2.msra.mxu0 0.0
    %167 = vmatprep.subr.mxu0 0.0
    %168 = vmatpush2.msra.mxu0 0.0
    %169 = vmatprep.subr.mxu0 0.0
    %170 = vmatpush2.msra.mxu0 0.0
    %171 = vmatprep.subr.mxu0 0.0
    %172 = vmatpush2.msra.mxu0 0.0
    %173 = vmatprep.subr.mxu0 0.0
    %174 = vmatpush2.msra.mxu0 0.0
    %175 = vmatprep.subr.mxu0 0.0
    %176 = vmatpush2.msra.mxu0 0.0
    %177 = vmatprep.subr.mxu0 0.0
    %178 = vmatpush2.msra.mxu0 0.0
    %179 = vmatprep.subr.mxu0 0.0
    %180 = vmatpush2.msra.mxu0 0.0
    %181 = vmatprep.subr.mxu0 0.0
    %182 = vmatpush2.msra.mxu0 0.0
    %183 = vmatprep.subr.mxu0 0.0
    %184 = vmatpush2.msra.mxu0 0.0
    %185 = vmatprep.subr.mxu0 0.0
    %186 = vmatpush2.msra.mxu0 0.0
    %187 = vmatprep.subr.mxu0 0.0
    %188 = vmatpush2.msra.mxu0 0.0
    %189 = vmatprep.subr.mxu0 0.0
    %190 = vmatpush2.msra.mxu0 0.0
    %191 = vmatprep.subr.mxu0 0.0
    %192 = vmatpush2.msra.mxu0 0.0
    %193 = vmatprep.subr.mxu0 0.0
    %194 = vmatpush2.msra.mxu0 0.0
    %195 = vmatprep.mubr.f32.mxu0 0.0
    %v196 = vand.u32 %v44, 4294901760
    %197 = vmatmul.mubr.f32.gmra.mxu0 %v196
    %v198 = vpop.f32.mrf.mxu0
    %v199 = vadd.f32 %v123, %v198
    %v200 = vpop.f32.mrf.mxu0
    %201 = vdwg.mxu0
    %202 = vmatprep.subr.mxu0 0.0
    %203 = vmatpush1.msra.mxu0 0.0
    %204 = vmatprep.subr.mxu0 0.0
    %205 = vmatpush1.msra.mxu0 0.0
    %206 = vmatprep.subr.mxu0 0.0
    %207 = vmatpush1.msra.mxu0 0.0
    %208 = vmatprep.subr.mxu0 0.0
    %209 = vmatpush1.msra.mxu0 0.0
    %210 = vmatprep.subr.mxu0 0.0
    %211 = vmatpush1.msra.mxu0 0.0
    %212 = vmatprep.subr.mxu0 0.0
    %213 = vmatpush1.msra.mxu0 0.0
    %214 = vmatprep.subr.mxu0 0.0
    %215 = vmatpush1.msra.mxu0 0.0
    %216 = vmatprep.subr.mxu0 0.0
    %217 = vmatpush1.msra.mxu0 0.0
    %218 = vmatprep.subr.mxu0 0.0
    %219 = vmatpush1.msra.mxu0 0.0
    %220 = vmatprep.subr.mxu0 0.0
    %221 = vmatpush1.msra.mxu0 0.0
    %222 = vmatprep.subr.mxu0 0.0
    %223 = vmatpush1.msra.mxu0 0.0
    %224 = vmatprep.subr.mxu0 0.0
    %225 = vmatpush1.msra.mxu0 0.0
    %226 = vmatprep.subr.mxu0 0.0
    %227 = vmatpush1.msra.mxu0 0.0
    %228 = vmatprep.subr.mxu0 0.0
    %229 = vmatpush1.msra.mxu0 0.0
    %230 = vmatprep.subr.mxu0 0.0
    %231 = vmatpush1.msra.mxu0 0.0
    %232 = vmatprep.subr.mxu0 0.0
    %v233 = vand.u32 %v48, 4294901760
    %v234 = vsub.f32 %v48, %v233
    %235 = vmatpush1.msra.mxu0 %v234
    %236 = vmatprep.subr.mxu0 0.0
    %237 = vmatpush2.msra.mxu0 0.0
    %238 = vmatprep.subr.mxu0 0.0
    %239 = vmatpush2.msra.mxu0 0.0
    %240 = vmatprep.subr.mxu0 0.0
    %241 = vmatpush2.msra.mxu0 0.0
    %242 = vmatprep.subr.mxu0 0.0
    %243 = vmatpush2.msra.mxu0 0.0
    %244 = vmatprep.subr.mxu0 0.0
    %245 = vmatpush2.msra.mxu0 0.0
    %246 = vmatprep.subr.mxu0 0.0
    %247 = vmatpush2.msra.mxu0 0.0
    %248 = vmatprep.subr.mxu0 0.0
    %249 = vmatpush2.msra.mxu0 0.0
    %250 = vmatprep.subr.mxu0 0.0
    %251 = vmatpush2.msra.mxu0 0.0
    %252 = vmatprep.subr.mxu0 0.0
    %253 = vmatpush2.msra.mxu0 0.0
    %254 = vmatprep.subr.mxu0 0.0
    %255 = vmatpush2.msra.mxu0 0.0
    %256 = vmatprep.subr.mxu0 0.0
    %257 = vmatpush2.msra.mxu0 0.0
    %258 = vmatprep.subr.mxu0 0.0
    %259 = vmatpush2.msra.mxu0 0.0
    %260 = vmatprep.subr.mxu0 0.0
    %261 = vmatpush2.msra.mxu0 0.0
    %262 = vmatprep.subr.mxu0 0.0
    %263 = vmatpush2.msra.mxu0 0.0
    %264 = vmatprep.subr.mxu0 0.0
    %265 = vmatpush2.msra.mxu0 0.0
    %266 = vmatprep.subr.mxu0 0.0
    %267 = vmatpush2.msra.mxu0 0.0
    %268 = vmatprep.mubr.f32.mxu0 0.0
    %v269 = vand.u32 %v44, 4294901760
    %v270 = vsub.f32 %v44, %v269
    %271 = vmatmul.mubr.f32.gmra.mxu0 %v270
    %v272 = vpop.f32.mrf.mxu0
    %v273 = vadd.f32 %v199, %v272
    %v274 = vpop.f32.mrf.mxu0
    %275 = vdwg.mxu0
    %276 = vmatprep.subr.mxu0 0.0
    %277 = vmatpush1.msra.mxu0 0.0
    %278 = vmatprep.subr.mxu0 0.0
    %279 = vmatpush1.msra.mxu0 0.0
    %280 = vmatprep.subr.mxu0 0.0
    %281 = vmatpush1.msra.mxu0 0.0
    %282 = vmatprep.subr.mxu0 0.0
    %283 = vmatpush1.msra.mxu0 0.0
    %284 = vmatprep.subr.mxu0 0.0
    %285 = vmatpush1.msra.mxu0 0.0
    %286 = vmatprep.subr.mxu0 0.0
    %287 = vmatpush1.msra.mxu0 0.0
    %288 = vmatprep.subr.mxu0 0.0
    %289 = vmatpush1.msra.mxu0 0.0
    %290 = vmatprep.subr.mxu0 0.0
    %291 = vmatpush1.msra.mxu0 0.0
    %292 = vmatprep.subr.mxu0 0.0
    %293 = vmatpush1.msra.mxu0 0.0
    %294 = vmatprep.subr.mxu0 0.0
    %295 = vmatpush1.msra.mxu0 0.0
    %296 = vmatprep.subr.mxu0 0.0
    %297 = vmatpush1.msra.mxu0 0.0
    %298 = vmatprep.subr.mxu0 0.0
    %299 = vmatpush1.msra.mxu0 0.0
    %300 = vmatprep.subr.mxu0 0.0
    %301 = vmatpush1.msra.mxu0 0.0
    %302 = vmatprep.subr.mxu0 0.0
    %303 = vmatpush1.msra.mxu0 0.0
    %304 = vmatprep.subr.mxu0 0.0
    %305 = vmatpush1.msra.mxu0 0.0
    %306 = vmatprep.subr.mxu0 0.0
    %v307 = vand.u32 %v48, 4294901760
    %308 = vmatpush1.msra.mxu0 %v307
    %309 = vmatprep.subr.mxu0 0.0
    %310 = vmatpush2.msra.mxu0 0.0
    %311 = vmatprep.subr.mxu0 0.0
    %312 = vmatpush2.msra.mxu0 0.0
    %313 = vmatprep.subr.mxu0 0.0
    %314 = vmatpush2.msra.mxu0 0.0
    %315 = vmatprep.subr.mxu0 0.0
    %316 = vmatpush2.msra.mxu0 0.0
    %317 = vmatprep.subr.mxu0 0.0
    %318 = vmatpush2.msra.mxu0 0.0
    %319 = vmatprep.subr.mxu0 0.0
    %320 = vmatpush2.msra.mxu0 0.0
    %321 = vmatprep.subr.mxu0 0.0
    %322 = vmatpush2.msra.mxu0 0.0
    %323 = vmatprep.subr.mxu0 0.0
    %324 = vmatpush2.msra.mxu0 0.0
    %325 = vmatprep.subr.mxu0 0.0
    %326 = vmatpush2.msra.mxu0 0.0
    %327 = vmatprep.subr.mxu0 0.0
    %328 = vmatpush2.msra.mxu0 0.0
    %329 = vmatprep.subr.mxu0 0.0
    %330 = vmatpush2.msra.mxu0 0.0
    %331 = vmatprep.subr.mxu0 0.0
    %332 = vmatpush2.msra.mxu0 0.0
    %333 = vmatprep.subr.mxu0 0.0
    %334 = vmatpush2.msra.mxu0 0.0
    %335 = vmatprep.subr.mxu0 0.0
    %336 = vmatpush2.msra.mxu0 0.0
    %337 = vmatprep.subr.mxu0 0.0
    %338 = vmatpush2.msra.mxu0 0.0
    %339 = vmatprep.subr.mxu0 0.0
    %340 = vmatpush2.msra.mxu0 0.0
    %341 = vmatprep.mubr.f32.mxu0 0.0
    %v342 = vand.u32 %v44, 4294901760
    %v343 = vsub.f32 %v44, %v342
    %v344 = vand.u32 %v343, 4294901760
    %345 = vmatmul.mubr.f32.gmra.mxu0 %v344
    %v346 = vpop.f32.mrf.mxu0
    %v347 = vadd.f32 %v273, %v346
    %v348 = vpop.f32.mrf.mxu0
    %349 = vdwg.mxu0
    %350 = vmatprep.subr.mxu0 0.0
    %351 = vmatpush1.msra.mxu0 0.0
    %352 = vmatprep.subr.mxu0 0.0
    %353 = vmatpush1.msra.mxu0 0.0
    %354 = vmatprep.subr.mxu0 0.0
    %355 = vmatpush1.msra.mxu0 0.0
    %356 = vmatprep.subr.mxu0 0.0
    %357 = vmatpush1.msra.mxu0 0.0
    %358 = vmatprep.subr.mxu0 0.0
    %359 = vmatpush1.msra.mxu0 0.0
    %360 = vmatprep.subr.mxu0 0.0
    %361 = vmatpush1.msra.mxu0 0.0
    %362 = vmatprep.subr.mxu0 0.0
    %363 = vmatpush1.msra.mxu0 0.0
    %364 = vmatprep.subr.mxu0 0.0
    %365 = vmatpush1.msra.mxu0 0.0
    %366 = vmatprep.subr.mxu0 0.0
    %367 = vmatpush1.msra.mxu0 0.0
    %368 = vmatprep.subr.mxu0 0.0
    %369 = vmatpush1.msra.mxu0 0.0
    %370 = vmatprep.subr.mxu0 0.0
    %371 = vmatpush1.msra.mxu0 0.0
    %372 = vmatprep.subr.mxu0 0.0
    %373 = vmatpush1.msra.mxu0 0.0
    %374 = vmatprep.subr.mxu0 0.0
    %375 = vmatpush1.msra.mxu0 0.0
    %376 = vmatprep.subr.mxu0 0.0
    %377 = vmatpush1.msra.mxu0 0.0
    %378 = vmatprep.subr.mxu0 0.0
    %379 = vmatpush1.msra.mxu0 0.0
    %380 = vmatprep.subr.mxu0 0.0
    %v381 = vand.u32 %v48, 4294901760
    %v382 = vsub.f32 %v48, %v381
    %v383 = vand.u32 %v382, 4294901760
    %384 = vmatpush1.msra.mxu0 %v383
    %385 = vmatprep.subr.mxu0 0.0
    %386 = vmatpush2.msra.mxu0 0.0
    %387 = vmatprep.subr.mxu0 0.0
    %388 = vmatpush2.msra.mxu0 0.0
    %389 = vmatprep.subr.mxu0 0.0
    %390 = vmatpush2.msra.mxu0 0.0
    %391 = vmatprep.subr.mxu0 0.0
    %392 = vmatpush2.msra.mxu0 0.0
    %393 = vmatprep.subr.mxu0 0.0
    %394 = vmatpush2.msra.mxu0 0.0
    %395 = vmatprep.subr.mxu0 0.0
    %396 = vmatpush2.msra.mxu0 0.0
    %397 = vmatprep.subr.mxu0 0.0
    %398 = vmatpush2.msra.mxu0 0.0
    %399 = vmatprep.subr.mxu0 0.0
    %400 = vmatpush2.msra.mxu0 0.0
    %401 = vmatprep.subr.mxu0 0.0
    %402 = vmatpush2.msra.mxu0 0.0
    %403 = vmatprep.subr.mxu0 0.0
    %404 = vmatpush2.msra.mxu0 0.0
    %405 = vmatprep.subr.mxu0 0.0
    %406 = vmatpush2.msra.mxu0 0.0
    %407 = vmatprep.subr.mxu0 0.0
    %408 = vmatpush2.msra.mxu0 0.0
    %409 = vmatprep.subr.mxu0 0.0
    %410 = vmatpush2.msra.mxu0 0.0
    %411 = vmatprep.subr.mxu0 0.0
    %412 = vmatpush2.msra.mxu0 0.0
    %413 = vmatprep.subr.mxu0 0.0
    %414 = vmatpush2.msra.mxu0 0.0
    %415 = vmatprep.subr.mxu0 0.0
    %416 = vmatpush2.msra.mxu0 0.0
    %417 = vmatprep.mubr.f32.mxu0 0.0
    %v418 = vand.u32 %v44, 4294901760
    %419 = vmatmul.mubr.f32.gmra.mxu0 %v418
    %v420 = vpop.f32.mrf.mxu0
    %v421 = vadd.f32 %v347, %v420
    %v422 = vpop.f32.mrf.mxu0
    %423 = vdwg.mxu0
    %424 = vmatprep.subr.mxu0 0.0
    %425 = vmatpush1.msra.mxu0 0.0
    %426 = vmatprep.subr.mxu0 0.0
    %427 = vmatpush1.msra.mxu0 0.0
    %428 = vmatprep.subr.mxu0 0.0
    %429 = vmatpush1.msra.mxu0 0.0
    %430 = vmatprep.subr.mxu0 0.0
    %431 = vmatpush1.msra.mxu0 0.0
    %432 = vmatprep.subr.mxu0 0.0
    %433 = vmatpush1.msra.mxu0 0.0
    %434 = vmatprep.subr.mxu0 0.0
    %435 = vmatpush1.msra.mxu0 0.0
    %436 = vmatprep.subr.mxu0 0.0
    %437 = vmatpush1.msra.mxu0 0.0
    %438 = vmatprep.subr.mxu0 0.0
    %439 = vmatpush1.msra.mxu0 0.0
    %440 = vmatprep.subr.mxu0 0.0
    %441 = vmatpush1.msra.mxu0 0.0
    %442 = vmatprep.subr.mxu0 0.0
    %443 = vmatpush1.msra.mxu0 0.0
    %444 = vmatprep.subr.mxu0 0.0
    %445 = vmatpush1.msra.mxu0 0.0
    %446 = vmatprep.subr.mxu0 0.0
    %447 = vmatpush1.msra.mxu0 0.0
    %448 = vmatprep.subr.mxu0 0.0
    %449 = vmatpush1.msra.mxu0 0.0
    %450 = vmatprep.subr.mxu0 0.0
    %451 = vmatpush1.msra.mxu0 0.0
    %452 = vmatprep.subr.mxu0 0.0
    %453 = vmatpush1.msra.mxu0 0.0
    %454 = vmatprep.subr.mxu0 0.0
    %v455 = vand.u32 %v48, 4294901760
    %456 = vmatpush1.msra.mxu0 %v455
    %457 = vmatprep.subr.mxu0 0.0
    %458 = vmatpush2.msra.mxu0 0.0
    %459 = vmatprep.subr.mxu0 0.0
    %460 = vmatpush2.msra.mxu0 0.0
    %461 = vmatprep.subr.mxu0 0.0
    %462 = vmatpush2.msra.mxu0 0.0
    %463 = vmatprep.subr.mxu0 0.0
    %464 = vmatpush2.msra.mxu0 0.0
    %465 = vmatprep.subr.mxu0 0.0
    %466 = vmatpush2.msra.mxu0 0.0
    %467 = vmatprep.subr.mxu0 0.0
    %468 = vmatpush2.msra.mxu0 0.0
    %469 = vmatprep.subr.mxu0 0.0
    %470 = vmatpush2.msra.mxu0 0.0
    %471 = vmatprep.subr.mxu0 0.0
    %472 = vmatpush2.msra.mxu0 0.0
    %473 = vmatprep.subr.mxu0 0.0
    %474 = vmatpush2.msra.mxu0 0.0
    %475 = vmatprep.subr.mxu0 0.0
    %476 = vmatpush2.msra.mxu0 0.0
    %477 = vmatprep.subr.mxu0 0.0
    %478 = vmatpush2.msra.mxu0 0.0
    %479 = vmatprep.subr.mxu0 0.0
    %480 = vmatpush2.msra.mxu0 0.0
    %481 = vmatprep.subr.mxu0 0.0
    %482 = vmatpush2.msra.mxu0 0.0
    %483 = vmatprep.subr.mxu0 0.0
    %484 = vmatpush2.msra.mxu0 0.0
    %485 = vmatprep.subr.mxu0 0.0
    %486 = vmatpush2.msra.mxu0 0.0
    %487 = vmatprep.subr.mxu0 0.0
    %488 = vmatpush2.msra.mxu0 0.0
    %489 = vmatprep.mubr.f32.mxu0 0.0
    %v490 = vand.u32 %v44, 4294901760
    %491 = vmatmul.mubr.f32.gmra.mxu0 %v490
    %v492 = vpop.f32.mrf.mxu0
    %v493 = vadd.f32 %v421, %v492
    %v494 = vpop.f32.mrf.mxu0
    %495 = vdwg.mxu0
    %v496 = vld [vmem:[#allocation2] sm:$0xf]
    %v497 = vadd.f32 %v496, %v493
    %498 = vst [vmem:[#allocation5] sm:$0xf] %v497
    // Predicated region
    $region18: #{tpu_custom_call.1} parent=1 // pred_check
      _
    $region19: #{tpu_custom_call.1} parent=1 // pred_check_branch
      %500 = sbr.rel (0) target = $region21
    $region20: #{tpu_custom_call.1} parent=1 // pred_region
      %s502 = ssub.s32 64, 64
      %503 = vsyncadd [#allocation4], %s502
      %s504 = smul.addr %s7, 64
      %s505 = scalar_lea.hbm %s3, %s504
      %s507 = sshll.u32 [#allocation5], 4
      %s508 = int_to_ptr.vmem [resolvable:$true] %s507
      %510 = dma.vmem_to_hbm [thread:$0]  %s508, 64, %s505, [#allocation4]
    $region21: #{tpu_custom_call.1} parent=1 // pred_fallthru
      _
    // Predicated region
    $region22: #{tpu_custom_call.1} parent=1 // pred_check
      _
    $region23: #{tpu_custom_call.1} parent=1 // pred_check_branch
      %512 = sbr.rel (0) target = $region25
    $region24: #{tpu_custom_call.1} parent=1 // pred_region
      %513 = dma.done [#allocation4], 64
    $region25: #{tpu_custom_call.1} parent=1 // pred_fallthru
      _
    %514 = vsyncpa [#allocation3], 1
    %515 = vsyncpa [#allocation4], 1

// kernel: tpu_custom_call.1
$region0: #{tpu_custom_call.1}
  #allocation0 [shape = 'u32[]', space=smem, size = 0x4, offset = 0x4, fixed_abs, tag = 'smem constant byte address 0x4 - core index']
  #allocation1 [shape = 'u32[144,128]{1,0:T(1,128)}', space=vmem, size = 0x12000, scoped, tag = 'internal scratch']
  %s0 = inlined_call_operand.hbm [shape: f32[4,128], index: 0, kind: input, shape index: {}, may-alias: {0,3}]
  %s1 = inlined_call_operand.vmem [shape: s8[4,5], index: 1, kind: input, shape index: {}]
  %s2 = inlined_call_operand.vmem [shape: f32[5,128], index: 2, kind: input, shape index: {}]
  %s3 = inlined_call_operand.hbm [shape: f32[4,128], index: 3, kind: output, shape index: {}, may-alias: {0,3}]
  %s4 = sld [smem:[#allocation0]]
  $region26: #{tpu_custom_call.1} parent=0
    _
  %s6 = ssub.s32 1, %s4
  %s7 = scalar_select 0, %s6, %s4
  $region1: #{tpu_custom_call.1} parent=0
    #allocation2 [shape = 'u8[2048]{0}', space=vmem, size = 0x800, scoped, tag = 'input window, operand 0, single buffered']
    #allocation3 [shape = 's32[1]{0}', space=sflag, size = 0x4, scoped, tag = 'scoped memory for tpu_custom_call.1']
    #allocation4 [shape = 's32[1]{0}', space=sflag, size = 0x4, scoped, tag = 'scoped memory for tpu_custom_call.1']
    #allocation5 [shape = 'u8[2048]{0}', space=vmem, size = 0x800, scoped, tag = 'output window, operand 0, single buffered']
    %8 = vsyncpa [#allocation3], 0
    %9 = vsyncpa [#allocation4], 0
    // Predicated region
    $region2: #{tpu_custom_call.1} parent=1 // pred_check
      _
    $region3: #{tpu_custom_call.1} parent=1 // pred_check_branch
      %11 = sbr.rel (0) target = $region5
    $region4: #{tpu_custom_call.1} parent=1 // pred_region
      %s13 = ssub.s32 64, 64
      %14 = vsyncadd [#allocation3], %s13
      %s16 = sshll.u32 [#allocation2], 4
      %s17 = int_to_ptr.vmem [resolvable:$true] %s16
      %19 = dma.hbm_to_vmem [thread:$0]  %s0, 64, %s17, [#allocation3]
    $region5: #{tpu_custom_call.1} parent=1 // pred_fallthru
      _
    // Predicated region
    $region6: #{tpu_custom_call.1} parent=1 // pred_check
      _
    $region7: #{tpu_custom_call.1} parent=1 // pred_check_branch
      %21 = sbr.rel (0) target = $region9
    $region8: #{tpu_custom_call.1} parent=1 // pred_region
      _
    $region9: #{tpu_custom_call.1} parent=1 // pred_fallthru
      _
    // Predicated region
    $region10: #{tpu_custom_call.1} parent=1 // pred_check
      _
    $region11: #{tpu_custom_call.1} parent=1 // pred_check_branch
      %23 = sbr.rel (0) target = $region13
    $region12: #{tpu_custom_call.1} parent=1 // pred_region
      _
    $region13: #{tpu_custom_call.1} parent=1 // pred_fallthru
      _
    // Predicated region
    $region14: #{tpu_custom_call.1} parent=1 // pred_check
      _
    $region15: #{tpu_custom_call.1} parent=1 // pred_check_branch
      %25 = sbr.rel (0) target = $region17
    $region16: #{tpu_custom_call.1} parent=1 // pred_region
      %26 = dma.done [#allocation3], 64
    $region17: #{tpu_custom_call.1} parent=1 // pred_fallthru
      _
    %v27 = vld [vmem:[%s1] sm:$0x1]
    %v28 = vunpack.c.0.s8 %v27
    %v29 = vcvt.s32.f32 %v28
    %v30 = vld [vmem:[%s2] sm:$0x1f]
    %vm31 = vcmask 39936
    %v33 = vsel %vm31, %v29, 0
    %vm35 = vcmask 1044480
    %v37 = vsel %vm35, %v30, 0
    %39 = vmatprep.subr.mxu0 0.0
    %40 = vmatpush1.msra.mxu0 0.0
    %41 = vmatprep.subr.mxu0 0.0
    %42 = vmatpush1.msra.mxu0 0.0
    %43 = vmatprep.subr.mxu0 0.0
    %44 = vmatpush1.msra.mxu0 0.0
    %45 = vmatprep.subr.mxu0 0.0
    %46 = vmatpush1.msra.mxu0 0.0
    %47 = vmatprep.subr.mxu0 0.0
    %48 = vmatpush1.msra.mxu0 0.0
    %49 = vmatprep.subr.mxu0 0.0
    %50 = vmatpush1.msra.mxu0 0.0
    %51 = vmatprep.subr.mxu0 0.0
    %52 = vmatpush1.msra.mxu0 0.0
    %53 = vmatprep.subr.mxu0 0.0
    %54 = vmatpush1.msra.mxu0 0.0
    %55 = vmatprep.subr.mxu0 0.0
    %56 = vmatpush1.msra.mxu0 0.0
    %57 = vmatprep.subr.mxu0 0.0
    %58 = vmatpush1.msra.mxu0 0.0
    %59 = vmatprep.subr.mxu0 0.0
    %60 = vmatpush1.msra.mxu0 0.0
    %61 = vmatprep.subr.mxu0 0.0
    %62 = vmatpush1.msra.mxu0 0.0
    %63 = vmatprep.subr.mxu0 0.0
    %64 = vmatpush1.msra.mxu0 0.0
    %65 = vmatprep.subr.mxu0 0.0
    %66 = vmatpush1.msra.mxu0 0.0
    %67 = vmatprep.subr.mxu0 0.0
    %68 = vmatpush1.msra.mxu0 0.0
    %69 = vmatprep.subr.mxu0 0.0
    %v70 = vand.u32 %v37, 4294901760
    %71 = vmatpush1.msra.mxu0 %v70
    %72 = vmatprep.subr.mxu0 0.0
    %73 = vmatpush2.msra.mxu0 0.0
    %74 = vmatprep.subr.mxu0 0.0
    %75 = vmatpush2.msra.mxu0 0.0
    %76 = vmatprep.subr.mxu0 0.0
    %77 = vmatpush2.msra.mxu0 0.0
    %78 = vmatprep.subr.mxu0 0.0
    %79 = vmatpush2.msra.mxu0 0.0
    %80 = vmatprep.subr.mxu0 0.0
    %81 = vmatpush2.msra.mxu0 0.0
    %82 = vmatprep.subr.mxu0 0.0
    %83 = vmatpush2.msra.mxu0 0.0
    %84 = vmatprep.subr.mxu0 0.0
    %85 = vmatpush2.msra.mxu0 0.0
    %86 = vmatprep.subr.mxu0 0.0
    %87 = vmatpush2.msra.mxu0 0.0
    %88 = vmatprep.subr.mxu0 0.0
    %89 = vmatpush2.msra.mxu0 0.0
    %90 = vmatprep.subr.mxu0 0.0
    %91 = vmatpush2.msra.mxu0 0.0
    %92 = vmatprep.subr.mxu0 0.0
    %93 = vmatpush2.msra.mxu0 0.0
    %94 = vmatprep.subr.mxu0 0.0
    %95 = vmatpush2.msra.mxu0 0.0
    %96 = vmatprep.subr.mxu0 0.0
    %97 = vmatpush2.msra.mxu0 0.0
    %98 = vmatprep.subr.mxu0 0.0
    %99 = vmatpush2.msra.mxu0 0.0
    %100 = vmatprep.subr.mxu0 0.0
    %101 = vmatpush2.msra.mxu0 0.0
    %102 = vmatprep.subr.mxu0 0.0
    %103 = vmatpush2.msra.mxu0 0.0
    %104 = vmatprep.mubr.f32.mxu0 0.0
    %v105 = vand.u32 %v33, 4294901760
    %v106 = vsub.f32 %v33, %v105
    %v107 = vand.u32 %v106, 4294901760
    %v108 = vsub.f32 %v106, %v107
    %v109 = vand.u32 %v108, 4294901760
    %110 = vmatmul.mubr.f32.gmra.mxu0 %v109
    %v111 = vpop.f32.mrf.mxu0
    %v112 = vadd.f32 0.0, %v111
    %v113 = vpop.f32.mrf.mxu0
    %114 = vdwg.mxu0
    %115 = vmatprep.subr.mxu0 0.0
    %116 = vmatpush1.msra.mxu0 0.0
    %117 = vmatprep.subr.mxu0 0.0
    %118 = vmatpush1.msra.mxu0 0.0
    %119 = vmatprep.subr.mxu0 0.0
    %120 = vmatpush1.msra.mxu0 0.0
    %121 = vmatprep.subr.mxu0 0.0
    %122 = vmatpush1.msra.mxu0 0.0
    %123 = vmatprep.subr.mxu0 0.0
    %124 = vmatpush1.msra.mxu0 0.0
    %125 = vmatprep.subr.mxu0 0.0
    %126 = vmatpush1.msra.mxu0 0.0
    %127 = vmatprep.subr.mxu0 0.0
    %128 = vmatpush1.msra.mxu0 0.0
    %129 = vmatprep.subr.mxu0 0.0
    %130 = vmatpush1.msra.mxu0 0.0
    %131 = vmatprep.subr.mxu0 0.0
    %132 = vmatpush1.msra.mxu0 0.0
    %133 = vmatprep.subr.mxu0 0.0
    %134 = vmatpush1.msra.mxu0 0.0
    %135 = vmatprep.subr.mxu0 0.0
    %136 = vmatpush1.msra.mxu0 0.0
    %137 = vmatprep.subr.mxu0 0.0
    %138 = vmatpush1.msra.mxu0 0.0
    %139 = vmatprep.subr.mxu0 0.0
    %140 = vmatpush1.msra.mxu0 0.0
    %141 = vmatprep.subr.mxu0 0.0
    %142 = vmatpush1.msra.mxu0 0.0
    %143 = vmatprep.subr.mxu0 0.0
    %144 = vmatpush1.msra.mxu0 0.0
    %145 = vmatprep.subr.mxu0 0.0
    %v146 = vand.u32 %v37, 4294901760
    %v147 = vsub.f32 %v37, %v146
    %v148 = vand.u32 %v147, 4294901760
    %v149 = vsub.f32 %v147, %v148
    %v150 = vand.u32 %v149, 4294901760
    %151 = vmatpush1.msra.mxu0 %v150
    %152 = vmatprep.subr.mxu0 0.0
    %153 = vmatpush2.msra.mxu0 0.0
    %154 = vmatprep.subr.mxu0 0.0
    %155 = vmatpush2.msra.mxu0 0.0
    %156 = vmatprep.subr.mxu0 0.0
    %157 = vmatpush2.msra.mxu0 0.0
    %158 = vmatprep.subr.mxu0 0.0
    %159 = vmatpush2.msra.mxu0 0.0
    %160 = vmatprep.subr.mxu0 0.0
    %161 = vmatpush2.msra.mxu0 0.0
    %162 = vmatprep.subr.mxu0 0.0
    %163 = vmatpush2.msra.mxu0 0.0
    %164 = vmatprep.subr.mxu0 0.0
    %165 = vmatpush2.msra.mxu0 0.0
    %166 = vmatprep.subr.mxu0 0.0
    %167 = vmatpush2.msra.mxu0 0.0
    %168 = vmatprep.subr.mxu0 0.0
    %169 = vmatpush2.msra.mxu0 0.0
    %170 = vmatprep.subr.mxu0 0.0
    %171 = vmatpush2.msra.mxu0 0.0
    %172 = vmatprep.subr.mxu0 0.0
    %173 = vmatpush2.msra.mxu0 0.0
    %174 = vmatprep.subr.mxu0 0.0
    %175 = vmatpush2.msra.mxu0 0.0
    %176 = vmatprep.subr.mxu0 0.0
    %177 = vmatpush2.msra.mxu0 0.0
    %178 = vmatprep.subr.mxu0 0.0
    %179 = vmatpush2.msra.mxu0 0.0
    %180 = vmatprep.subr.mxu0 0.0
    %181 = vmatpush2.msra.mxu0 0.0
    %182 = vmatprep.subr.mxu0 0.0
    %183 = vmatpush2.msra.mxu0 0.0
    %184 = vmatprep.mubr.f32.mxu0 0.0
    %v185 = vand.u32 %v33, 4294901760
    %186 = vmatmul.mubr.f32.gmra.mxu0 %v185
    %v187 = vpop.f32.mrf.mxu0
    %v188 = vadd.f32 %v112, %v187
    %v189 = vpop.f32.mrf.mxu0
    %190 = vdwg.mxu0
    %191 = vmatprep.subr.mxu0 0.0
    %192 = vmatpush1.msra.mxu0 0.0
    %193 = vmatprep.subr.mxu0 0.0
    %194 = vmatpush1.msra.mxu0 0.0
    %195 = vmatprep.subr.mxu0 0.0
    %196 = vmatpush1.msra.mxu0 0.0
    %197 = vmatprep.subr.mxu0 0.0
    %198 = vmatpush1.msra.mxu0 0.0
    %199 = vmatprep.subr.mxu0 0.0
    %200 = vmatpush1.msra.mxu0 0.0
    %201 = vmatprep.subr.mxu0 0.0
    %202 = vmatpush1.msra.mxu0 0.0
    %203 = vmatprep.subr.mxu0 0.0
    %204 = vmatpush1.msra.mxu0 0.0
    %205 = vmatprep.subr.mxu0 0.0
    %206 = vmatpush1.msra.mxu0 0.0
    %207 = vmatprep.subr.mxu0 0.0
    %208 = vmatpush1.msra.mxu0 0.0
    %209 = vmatprep.subr.mxu0 0.0
    %210 = vmatpush1.msra.mxu0 0.0
    %211 = vmatprep.subr.mxu0 0.0
    %212 = vmatpush1.msra.mxu0 0.0
    %213 = vmatprep.subr.mxu0 0.0
    %214 = vmatpush1.msra.mxu0 0.0
    %215 = vmatprep.subr.mxu0 0.0
    %216 = vmatpush1.msra.mxu0 0.0
    %217 = vmatprep.subr.mxu0 0.0
    %218 = vmatpush1.msra.mxu0 0.0
    %219 = vmatprep.subr.mxu0 0.0
    %220 = vmatpush1.msra.mxu0 0.0
    %221 = vmatprep.subr.mxu0 0.0
    %v222 = vand.u32 %v37, 4294901760
    %v223 = vsub.f32 %v37, %v222
    %224 = vmatpush1.msra.mxu0 %v223
    %225 = vmatprep.subr.mxu0 0.0
    %226 = vmatpush2.msra.mxu0 0.0
    %227 = vmatprep.subr.mxu0 0.0
    %228 = vmatpush2.msra.mxu0 0.0
    %229 = vmatprep.subr.mxu0 0.0
    %230 = vmatpush2.msra.mxu0 0.0
    %231 = vmatprep.subr.mxu0 0.0
    %232 = vmatpush2.msra.mxu0 0.0
    %233 = vmatprep.subr.mxu0 0.0
    %234 = vmatpush2.msra.mxu0 0.0
    %235 = vmatprep.subr.mxu0 0.0
    %236 = vmatpush2.msra.mxu0 0.0
    %237 = vmatprep.subr.mxu0 0.0
    %238 = vmatpush2.msra.mxu0 0.0
    %239 = vmatprep.subr.mxu0 0.0
    %240 = vmatpush2.msra.mxu0 0.0
    %241 = vmatprep.subr.mxu0 0.0
    %242 = vmatpush2.msra.mxu0 0.0
    %243 = vmatprep.subr.mxu0 0.0
    %244 = vmatpush2.msra.mxu0 0.0
    %245 = vmatprep.subr.mxu0 0.0
    %246 = vmatpush2.msra.mxu0 0.0
    %247 = vmatprep.subr.mxu0 0.0
    %248 = vmatpush2.msra.mxu0 0.0
    %249 = vmatprep.subr.mxu0 0.0
    %250 = vmatpush2.msra.mxu0 0.0
    %251 = vmatprep.subr.mxu0 0.0
    %252 = vmatpush2.msra.mxu0 0.0
    %253 = vmatprep.subr.mxu0 0.0
    %254 = vmatpush2.msra.mxu0 0.0
    %255 = vmatprep.subr.mxu0 0.0
    %256 = vmatpush2.msra.mxu0 0.0
    %257 = vmatprep.mubr.f32.mxu0 0.0
    %v258 = vand.u32 %v33, 4294901760
    %v259 = vsub.f32 %v33, %v258
    %260 = vmatmul.mubr.f32.gmra.mxu0 %v259
    %v261 = vpop.f32.mrf.mxu0
    %v262 = vadd.f32 %v188, %v261
    %v263 = vpop.f32.mrf.mxu0
    %264 = vdwg.mxu0
    %265 = vmatprep.subr.mxu0 0.0
    %266 = vmatpush1.msra.mxu0 0.0
    %267 = vmatprep.subr.mxu0 0.0
    %268 = vmatpush1.msra.mxu0 0.0
    %269 = vmatprep.subr.mxu0 0.0
    %270 = vmatpush1.msra.mxu0 0.0
    %271 = vmatprep.subr.mxu0 0.0
    %272 = vmatpush1.msra.mxu0 0.0
    %273 = vmatprep.subr.mxu0 0.0
    %274 = vmatpush1.msra.mxu0 0.0
    %275 = vmatprep.subr.mxu0 0.0
    %276 = vmatpush1.msra.mxu0 0.0
    %277 = vmatprep.subr.mxu0 0.0
    %278 = vmatpush1.msra.mxu0 0.0
    %279 = vmatprep.subr.mxu0 0.0
    %280 = vmatpush1.msra.mxu0 0.0
    %281 = vmatprep.subr.mxu0 0.0
    %282 = vmatpush1.msra.mxu0 0.0
    %283 = vmatprep.subr.mxu0 0.0
    %284 = vmatpush1.msra.mxu0 0.0
    %285 = vmatprep.subr.mxu0 0.0
    %286 = vmatpush1.msra.mxu0 0.0
    %287 = vmatprep.subr.mxu0 0.0
    %288 = vmatpush1.msra.mxu0 0.0
    %289 = vmatprep.subr.mxu0 0.0
    %290 = vmatpush1.msra.mxu0 0.0
    %291 = vmatprep.subr.mxu0 0.0
    %292 = vmatpush1.msra.mxu0 0.0
    %293 = vmatprep.subr.mxu0 0.0
    %294 = vmatpush1.msra.mxu0 0.0
    %295 = vmatprep.subr.mxu0 0.0
    %v296 = vand.u32 %v37, 4294901760
    %297 = vmatpush1.msra.mxu0 %v296
    %298 = vmatprep.subr.mxu0 0.0
    %299 = vmatpush2.msra.mxu0 0.0
    %300 = vmatprep.subr.mxu0 0.0
    %301 = vmatpush2.msra.mxu0 0.0
    %302 = vmatprep.subr.mxu0 0.0
    %303 = vmatpush2.msra.mxu0 0.0
    %304 = vmatprep.subr.mxu0 0.0
    %305 = vmatpush2.msra.mxu0 0.0
    %306 = vmatprep.subr.mxu0 0.0
    %307 = vmatpush2.msra.mxu0 0.0
    %308 = vmatprep.subr.mxu0 0.0
    %309 = vmatpush2.msra.mxu0 0.0
    %310 = vmatprep.subr.mxu0 0.0
    %311 = vmatpush2.msra.mxu0 0.0
    %312 = vmatprep.subr.mxu0 0.0
    %313 = vmatpush2.msra.mxu0 0.0
    %314 = vmatprep.subr.mxu0 0.0
    %315 = vmatpush2.msra.mxu0 0.0
    %316 = vmatprep.subr.mxu0 0.0
    %317 = vmatpush2.msra.mxu0 0.0
    %318 = vmatprep.subr.mxu0 0.0
    %319 = vmatpush2.msra.mxu0 0.0
    %320 = vmatprep.subr.mxu0 0.0
    %321 = vmatpush2.msra.mxu0 0.0
    %322 = vmatprep.subr.mxu0 0.0
    %323 = vmatpush2.msra.mxu0 0.0
    %324 = vmatprep.subr.mxu0 0.0
    %325 = vmatpush2.msra.mxu0 0.0
    %326 = vmatprep.subr.mxu0 0.0
    %327 = vmatpush2.msra.mxu0 0.0
    %328 = vmatprep.subr.mxu0 0.0
    %329 = vmatpush2.msra.mxu0 0.0
    %330 = vmatprep.mubr.f32.mxu0 0.0
    %v331 = vand.u32 %v33, 4294901760
    %v332 = vsub.f32 %v33, %v331
    %v333 = vand.u32 %v332, 4294901760
    %334 = vmatmul.mubr.f32.gmra.mxu0 %v333
    %v335 = vpop.f32.mrf.mxu0
    %v336 = vadd.f32 %v262, %v335
    %v337 = vpop.f32.mrf.mxu0
    %338 = vdwg.mxu0
    %339 = vmatprep.subr.mxu0 0.0
    %340 = vmatpush1.msra.mxu0 0.0
    %341 = vmatprep.subr.mxu0 0.0
    %342 = vmatpush1.msra.mxu0 0.0
    %343 = vmatprep.subr.mxu0 0.0
    %344 = vmatpush1.msra.mxu0 0.0
    %345 = vmatprep.subr.mxu0 0.0
    %346 = vmatpush1.msra.mxu0 0.0
    %347 = vmatprep.subr.mxu0 0.0
    %348 = vmatpush1.msra.mxu0 0.0
    %349 = vmatprep.subr.mxu0 0.0
    %350 = vmatpush1.msra.mxu0 0.0
    %351 = vmatprep.subr.mxu0 0.0
    %352 = vmatpush1.msra.mxu0 0.0
    %353 = vmatprep.subr.mxu0 0.0
    %354 = vmatpush1.msra.mxu0 0.0
    %355 = vmatprep.subr.mxu0 0.0
    %356 = vmatpush1.msra.mxu0 0.0
    %357 = vmatprep.subr.mxu0 0.0
    %358 = vmatpush1.msra.mxu0 0.0
    %359 = vmatprep.subr.mxu0 0.0
    %360 = vmatpush1.msra.mxu0 0.0
    %361 = vmatprep.subr.mxu0 0.0
    %362 = vmatpush1.msra.mxu0 0.0
    %363 = vmatprep.subr.mxu0 0.0
    %364 = vmatpush1.msra.mxu0 0.0
    %365 = vmatprep.subr.mxu0 0.0
    %366 = vmatpush1.msra.mxu0 0.0
    %367 = vmatprep.subr.mxu0 0.0
    %368 = vmatpush1.msra.mxu0 0.0
    %369 = vmatprep.subr.mxu0 0.0
    %v370 = vand.u32 %v37, 4294901760
    %v371 = vsub.f32 %v37, %v370
    %v372 = vand.u32 %v371, 4294901760
    %373 = vmatpush1.msra.mxu0 %v372
    %374 = vmatprep.subr.mxu0 0.0
    %375 = vmatpush2.msra.mxu0 0.0
    %376 = vmatprep.subr.mxu0 0.0
    %377 = vmatpush2.msra.mxu0 0.0
    %378 = vmatprep.subr.mxu0 0.0
    %379 = vmatpush2.msra.mxu0 0.0
    %380 = vmatprep.subr.mxu0 0.0
    %381 = vmatpush2.msra.mxu0 0.0
    %382 = vmatprep.subr.mxu0 0.0
    %383 = vmatpush2.msra.mxu0 0.0
    %384 = vmatprep.subr.mxu0 0.0
    %385 = vmatpush2.msra.mxu0 0.0
    %386 = vmatprep.subr.mxu0 0.0
    %387 = vmatpush2.msra.mxu0 0.0
    %388 = vmatprep.subr.mxu0 0.0
    %389 = vmatpush2.msra.mxu0 0.0
    %390 = vmatprep.subr.mxu0 0.0
    %391 = vmatpush2.msra.mxu0 0.0
    %392 = vmatprep.subr.mxu0 0.0
    %393 = vmatpush2.msra.mxu0 0.0
    %394 = vmatprep.subr.mxu0 0.0
    %395 = vmatpush2.msra.mxu0 0.0
    %396 = vmatprep.subr.mxu0 0.0
    %397 = vmatpush2.msra.mxu0 0.0
    %398 = vmatprep.subr.mxu0 0.0
    %399 = vmatpush2.msra.mxu0 0.0
    %400 = vmatprep.subr.mxu0 0.0
    %401 = vmatpush2.msra.mxu0 0.0
    %402 = vmatprep.subr.mxu0 0.0
    %403 = vmatpush2.msra.mxu0 0.0
    %404 = vmatprep.subr.mxu0 0.0
    %405 = vmatpush2.msra.mxu0 0.0
    %406 = vmatprep.mubr.f32.mxu0 0.0
    %v407 = vand.u32 %v33, 4294901760
    %408 = vmatmul.mubr.f32.gmra.mxu0 %v407
    %v409 = vpop.f32.mrf.mxu0
    %v410 = vadd.f32 %v336, %v409
    %v411 = vpop.f32.mrf.mxu0
    %412 = vdwg.mxu0
    %413 = vmatprep.subr.mxu0 0.0
    %414 = vmatpush1.msra.mxu0 0.0
    %415 = vmatprep.subr.mxu0 0.0
    %416 = vmatpush1.msra.mxu0 0.0
    %417 = vmatprep.subr.mxu0 0.0
    %418 = vmatpush1.msra.mxu0 0.0
    %419 = vmatprep.subr.mxu0 0.0
    %420 = vmatpush1.msra.mxu0 0.0
    %421 = vmatprep.subr.mxu0 0.0
    %422 = vmatpush1.msra.mxu0 0.0
    %423 = vmatprep.subr.mxu0 0.0
    %424 = vmatpush1.msra.mxu0 0.0
    %425 = vmatprep.subr.mxu0 0.0
    %426 = vmatpush1.msra.mxu0 0.0
    %427 = vmatprep.subr.mxu0 0.0
    %428 = vmatpush1.msra.mxu0 0.0
    %429 = vmatprep.subr.mxu0 0.0
    %430 = vmatpush1.msra.mxu0 0.0
    %431 = vmatprep.subr.mxu0 0.0
    %432 = vmatpush1.msra.mxu0 0.0
    %433 = vmatprep.subr.mxu0 0.0
    %434 = vmatpush1.msra.mxu0 0.0
    %435 = vmatprep.subr.mxu0 0.0
    %436 = vmatpush1.msra.mxu0 0.0
    %437 = vmatprep.subr.mxu0 0.0
    %438 = vmatpush1.msra.mxu0 0.0
    %439 = vmatprep.subr.mxu0 0.0
    %440 = vmatpush1.msra.mxu0 0.0
    %441 = vmatprep.subr.mxu0 0.0
    %442 = vmatpush1.msra.mxu0 0.0
    %443 = vmatprep.subr.mxu0 0.0
    %v444 = vand.u32 %v37, 4294901760
    %445 = vmatpush1.msra.mxu0 %v444
    %446 = vmatprep.subr.mxu0 0.0
    %447 = vmatpush2.msra.mxu0 0.0
    %448 = vmatprep.subr.mxu0 0.0
    %449 = vmatpush2.msra.mxu0 0.0
    %450 = vmatprep.subr.mxu0 0.0
    %451 = vmatpush2.msra.mxu0 0.0
    %452 = vmatprep.subr.mxu0 0.0
    %453 = vmatpush2.msra.mxu0 0.0
    %454 = vmatprep.subr.mxu0 0.0
    %455 = vmatpush2.msra.mxu0 0.0
    %456 = vmatprep.subr.mxu0 0.0
    %457 = vmatpush2.msra.mxu0 0.0
    %458 = vmatprep.subr.mxu0 0.0
    %459 = vmatpush2.msra.mxu0 0.0
    %460 = vmatprep.subr.mxu0 0.0
    %461 = vmatpush2.msra.mxu0 0.0
    %462 = vmatprep.subr.mxu0 0.0
    %463 = vmatpush2.msra.mxu0 0.0
    %464 = vmatprep.subr.mxu0 0.0
    %465 = vmatpush2.msra.mxu0 0.0
    %466 = vmatprep.subr.mxu0 0.0
    %467 = vmatpush2.msra.mxu0 0.0
    %468 = vmatprep.subr.mxu0 0.0
    %469 = vmatpush2.msra.mxu0 0.0
    %470 = vmatprep.subr.mxu0 0.0
    %471 = vmatpush2.msra.mxu0 0.0
    %472 = vmatprep.subr.mxu0 0.0
    %473 = vmatpush2.msra.mxu0 0.0
    %474 = vmatprep.subr.mxu0 0.0
    %475 = vmatpush2.msra.mxu0 0.0
    %476 = vmatprep.subr.mxu0 0.0
    %477 = vmatpush2.msra.mxu0 0.0
    %478 = vmatprep.mubr.f32.mxu0 0.0
    %v479 = vand.u32 %v33, 4294901760
    %480 = vmatmul.mubr.f32.gmra.mxu0 %v479
    %v481 = vpop.f32.mrf.mxu0
    %v482 = vadd.f32 %v410, %v481
    %v483 = vpop.f32.mrf.mxu0
    %484 = vdwg.mxu0
    %v485 = vld [vmem:[#allocation2] sm:$0xf]
    %v486 = vadd.f32 %v485, %v482
    %487 = vst [vmem:[#allocation5] sm:$0xf] %v486
    // Predicated region
    $region18: #{tpu_custom_call.1} parent=1 // pred_check
      _
    $region19: #{tpu_custom_call.1} parent=1 // pred_check_branch
      %489 = sbr.rel (0) target = $region21
    $region20: #{tpu_custom_call.1} parent=1 // pred_region
      %s491 = ssub.s32 64, 64
      %492 = vsyncadd [#allocation4], %s491
      %s494 = sshll.u32 [#allocation5], 4
      %s495 = int_to_ptr.vmem [resolvable:$true] %s494
      %497 = dma.vmem_to_hbm [thread:$0]  %s495, 64, %s3, [#allocation4]
    $region21: #{tpu_custom_call.1} parent=1 // pred_fallthru
      _
    // Predicated region
    $region22: #{tpu_custom_call.1} parent=1 // pred_check
      _
    $region23: #{tpu_custom_call.1} parent=1 // pred_check_branch
      %499 = sbr.rel (0) target = $region25
    $region24: #{tpu_custom_call.1} parent=1 // pred_region
      %500 = dma.done [#allocation4], 64
    $region25: #{tpu_custom_call.1} parent=1 // pred_fallthru
      _
    %501 = vsyncpa [#allocation3], 1
    %502 = vsyncpa [#allocation4], 1

// kernel: tpu_custom_call.1
$region0: #{tpu_custom_call.1}
  #allocation0 [shape = 'u32[]', space=smem, size = 0x4, offset = 0x4, fixed_abs, tag = 'smem constant byte address 0x4 - core index']
  #allocation1 [shape = 'u32[144,128]{1,0:T(1,128)}', space=vmem, size = 0x12000, scoped, tag = 'internal scratch']
  %s0 = inlined_call_operand.hbm [shape: f32[4,128], index: 0, kind: input, shape index: {}, may-alias: {0,3}]
  %s1 = inlined_call_operand.vmem [shape: s8[4,5], index: 1, kind: input, shape index: {}]
  %s2 = inlined_call_operand.vmem [shape: f32[5,128], index: 2, kind: input, shape index: {}]
  %s3 = inlined_call_operand.hbm [shape: f32[4,128], index: 3, kind: output, shape index: {}, may-alias: {0,3}]
  %s4 = sld [smem:[#allocation0]]
  $region26: #{tpu_custom_call.1} parent=0
    _
  %s6 = ssub.s32 1, %s4
  %s7 = scalar_select 0, %s6, %s4
  $region1: #{tpu_custom_call.1} parent=0
    #allocation2 [shape = 'u8[2048]{0}', space=vmem, size = 0x800, scoped, tag = 'input window, operand 0, single buffered']
    #allocation3 [shape = 's32[1]{0}', space=sflag, size = 0x4, scoped, tag = 'scoped memory for tpu_custom_call.1']
    #allocation4 [shape = 's32[1]{0}', space=sflag, size = 0x4, scoped, tag = 'scoped memory for tpu_custom_call.1']
    #allocation5 [shape = 'u8[2048]{0}', space=vmem, size = 0x800, scoped, tag = 'output window, operand 0, single buffered']
    %8 = vsyncpa [#allocation3], 0
    %9 = vsyncpa [#allocation4], 0
    // Predicated region
    $region2: #{tpu_custom_call.1} parent=1 // pred_check
      _
    $region3: #{tpu_custom_call.1} parent=1 // pred_check_branch
      %11 = sbr.rel (0) target = $region5
    $region4: #{tpu_custom_call.1} parent=1 // pred_region
      %s13 = ssub.s32 64, 64
      %14 = vsyncadd [#allocation3], %s13
      %s16 = sshll.u32 [#allocation2], 4
      %s17 = int_to_ptr.vmem [resolvable:$true] %s16
      %19 = dma.hbm_to_vmem [thread:$0]  %s0, 64, %s17, [#allocation3]
    $region5: #{tpu_custom_call.1} parent=1 // pred_fallthru
      _
    // Predicated region
    $region6: #{tpu_custom_call.1} parent=1 // pred_check
      _
    $region7: #{tpu_custom_call.1} parent=1 // pred_check_branch
      %21 = sbr.rel (0) target = $region9
    $region8: #{tpu_custom_call.1} parent=1 // pred_region
      _
    $region9: #{tpu_custom_call.1} parent=1 // pred_fallthru
      _
    // Predicated region
    $region10: #{tpu_custom_call.1} parent=1 // pred_check
      _
    $region11: #{tpu_custom_call.1} parent=1 // pred_check_branch
      %23 = sbr.rel (0) target = $region13
    $region12: #{tpu_custom_call.1} parent=1 // pred_region
      _
    $region13: #{tpu_custom_call.1} parent=1 // pred_fallthru
      _
    // Predicated region
    $region14: #{tpu_custom_call.1} parent=1 // pred_check
      _
    $region15: #{tpu_custom_call.1} parent=1 // pred_check_branch
      %25 = sbr.rel (0) target = $region17
    $region16: #{tpu_custom_call.1} parent=1 // pred_region
      %26 = dma.done [#allocation3], 64
    $region17: #{tpu_custom_call.1} parent=1 // pred_fallthru
      _
    %v27 = vld [vmem:[#allocation2] sm:$0xf]
    %v28 = vld [vmem:[%s2] sm:$0x1]
    %v29 = vlaneseq
    %v30 = vshrl.u32 %v29, 7
    %v31 = vsub.s32 0, %v30
    %v32 = vrot.slane %v28, %v31
    %v33 = vadd.f32 %v27, %v32
    %v34 = vld [vmem:[%s1] sm:$0x1]
    %v35 = vunpack.c.0.s8 %v34
    %v36 = vcvt.s32.f32 %v35
    %v37 = vld [vmem:[%s2 + $0x1] sm:$0x1]
    %39 = vset.pattern.permute.xlu0 1
    %40 = vperm.xlu0 %39, %v36
    %v41 = vpop.permute.xlu0 %40
    %v44 = vunpack.c.l.s4 839922192
    %v45 = vunpack.c.0.s8 %v44
    %v46 = vlaneseq
    %v47 = vshrl.u32 %v46, 7
    %v48 = vsub.s32 %v45, %v47
    %v49 = vrot.slane %v41, %v48
    %v50 = vlaneseq
    %v51 = vshrl.u32 %v50, 7
    %v52 = vsub.s32 0, %v51
    %v53 = vrot.slane %v37, %v52
    %v54 = vmul.f32 %v49, %v53
    %v55 = vadd.f32 %v33, %v54
    %v56 = vld [vmem:[%s2 + $0x2] sm:$0x1]
    %57 = vset.pattern.permute.xlu0 2
    %58 = vperm.xlu0 %57, %v36
    %v59 = vpop.permute.xlu0 %58
    %v62 = vunpack.c.l.s4 839922192
    %v63 = vunpack.c.0.s8 %v62
    %v64 = vlaneseq
    %v65 = vshrl.u32 %v64, 7
    %v66 = vsub.s32 %v63, %v65
    %v67 = vrot.slane %v59, %v66
    %v68 = vlaneseq
    %v69 = vshrl.u32 %v68, 7
    %v70 = vsub.s32 0, %v69
    %v71 = vrot.slane %v56, %v70
    %v72 = vmul.f32 %v67, %v71
    %v73 = vadd.f32 %v55, %v72
    %v74 = vld [vmem:[%s2 + $0x3] sm:$0x1]
    %75 = vset.pattern.permute.xlu0 3
    %76 = vperm.xlu0 %75, %v36
    %v77 = vpop.permute.xlu0 %76
    %v80 = vunpack.c.l.s4 839922192
    %v81 = vunpack.c.0.s8 %v80
    %v82 = vlaneseq
    %v83 = vshrl.u32 %v82, 7
    %v84 = vsub.s32 %v81, %v83
    %v85 = vrot.slane %v77, %v84
    %v86 = vlaneseq
    %v87 = vshrl.u32 %v86, 7
    %v88 = vsub.s32 0, %v87
    %v89 = vrot.slane %v74, %v88
    %v90 = vmul.f32 %v85, %v89
    %v91 = vadd.f32 %v73, %v90
    %v92 = vld [vmem:[%s2 + $0x4] sm:$0x1]
    %93 = vset.pattern.permute.xlu0 4
    %94 = vperm.xlu0 %93, %v36
    %v95 = vpop.permute.xlu0 %94
    %v98 = vunpack.c.l.s4 839922192
    %v99 = vunpack.c.0.s8 %v98
    %v100 = vlaneseq
    %v101 = vshrl.u32 %v100, 7
    %v102 = vsub.s32 %v99, %v101
    %v103 = vrot.slane %v95, %v102
    %v104 = vlaneseq
    %v105 = vshrl.u32 %v104, 7
    %v106 = vsub.s32 0, %v105
    %v107 = vrot.slane %v92, %v106
    %v108 = vmul.f32 %v103, %v107
    %v109 = vadd.f32 %v91, %v108
    %110 = vst [vmem:[#allocation5] sm:$0xf] %v109
    // Predicated region
    $region18: #{tpu_custom_call.1} parent=1 // pred_check
      _
    $region19: #{tpu_custom_call.1} parent=1 // pred_check_branch
      %112 = sbr.rel (0) target = $region21
    $region20: #{tpu_custom_call.1} parent=1 // pred_region
      %s114 = ssub.s32 64, 64
      %115 = vsyncadd [#allocation4], %s114
      %s117 = sshll.u32 [#allocation5], 4
      %s118 = int_to_ptr.vmem [resolvable:$true] %s117
      %120 = dma.vmem_to_hbm [thread:$0]  %s118, 64, %s3, [#allocation4]
    $region21: #{tpu_custom_call.1} parent=1 // pred_fallthru
      _
    // Predicated region
    $region22: #{tpu_custom_call.1} parent=1 // pred_check
      _
    $region23: #{tpu_custom_call.1} parent=1 // pred_check_branch
      %122 = sbr.rel (0) target = $region25
    $region24: #{tpu_custom_call.1} parent=1 // pred_region
      %123 = dma.done [#allocation4], 64
    $region25: #{tpu_custom_call.1} parent=1 // pred_fallthru
      _
    %124 = vsyncpa [#allocation3], 1
    %125 = vsyncpa [#allocation4], 1

</llo_original>
